<compile_context>
chip_gen: v6e
topology: v6e:2x2x1
jax: 0.10.0
libtpu: 0.0.40
codegen_flags: <defaults>
</compile_context>

<pallas_src>
import functools

import jax
import jax.numpy as jnp
from jax import lax
from jax.experimental import pallas as pl
from jax.experimental.pallas import tpu as pltpu


DROPOUT_P = 0.25
KEEP_PROB = 1.0 - DROPOUT_P
INV_KEEP = 1.0 / KEEP_PROB
# keep iff hash_u32 < KEEP_PROB * 2^32   (0xC0000000 for p = 0.25)
_KEEP_THRESHOLD = int(KEEP_PROB * (1 << 32)) & 0xFFFFFFFF

LANE = 128
SUBLANE = 8


def _round_up(x, m):
    return (x + m - 1) // m * m


def _mlp_kernel(x_ref, w1_ref, b1_ref, w2_ref, b2_ref, o_ref,
                *, seed, tile_rows, hidden_pad, apply_dropout):
    i = pl.program_id(0)

    # ---- hidden layer: pre = x @ W1 + b1  (MXU, f32 accumulate) ----
    x = x_ref[...]
    pre = jnp.dot(x, w1_ref[...], preferred_element_type=jnp.float32) + b1_ref[...]

    if apply_dropout:
        # Counter-based hash PRNG over *global* element ids: deterministic in
        # `seed`, distinct per grid tile, no TPU-only primitives required.
        rows = lax.broadcasted_iota(jnp.int32, pre.shape, 0)
        cols = lax.broadcasted_iota(jnp.int32, pre.shape, 1)
        gid = rows * hidden_pad + cols + i * (tile_rows * hidden_pad)

        seed_mix = jnp.uint32((int(seed) * 0x9E3779B9 + 0x7F4A7C15) & 0xFFFFFFFF)
        z = gid.astype(jnp.uint32) + seed_mix
        # splitmix32 finalizer (xor-shift-multiply), pure 32-bit integer VPU ops
        z = (z ^ (z >> 16)) * jnp.uint32(0x7FEB352D)
        z = (z ^ (z >> 15)) * jnp.uint32(0x846CA68B)
        z = z ^ (z >> 16)

        keep = z < jnp.uint32(_KEEP_THRESHOLD)
        # fused ReLU + dropout (training-mode inverted scaling): one select
        h = jnp.where(jnp.logical_and(keep, pre > 0.0), pre * INV_KEEP, 0.0)
    else:
        h = jnp.maximum(pre, 0.0)

    # ---- output layer: out = h @ W2 + b2 ----
    out = jnp.dot(h, w2_ref[...], preferred_element_type=jnp.float32) + b2_ref[...]
    o_ref[...] = out.astype(o_ref.dtype)


def mlp_forward(x, w1, b1, w2, b2, seed, *, training=True, tile_rows=512):
    """x: (B, In) f32; w1: (In, H); b1: (1, H); w2: (H, Out); b2: (1, Out).

    Weights are stored transposed vs. PyTorch nn.Linear (i.e. already (in, out)).
    """
    B, in_features = x.shape
    hidden = w1.shape[1]
    out_features = w2.shape[1]

    # Lane-dense padding of the feature dims (zeros contribute nothing).
    h_pad = _round_up(hidden, LANE)
    o_pad = _round_up(out_features, LANE)
    w1p = jnp.pad(w1, ((0, 0), (0, h_pad - hidden)))
    b1p = jnp.pad(b1, ((0, 0), (0, h_pad - hidden)))
    w2p = jnp.pad(w2, ((0, h_pad - hidden), (0, o_pad - out_features)))
    b2p = jnp.pad(b2, ((0, 0), (0, o_pad - out_features)))

    # Batch tiling: large tiles for pipelining; pad B so the grid divides evenly.
    tm = max(SUBLANE, min(tile_rows, _round_up(B, SUBLANE)))
    b_pad = _round_up(B, tm)
    xp = jnp.pad(x, ((0, b_pad - B), (0, 0)))
    grid = (b_pad // tm,)

    kernel = functools.partial(
        _mlp_kernel,
        seed=int(seed),
        tile_rows=tm,
        hidden_pad=h_pad,
        apply_dropout=training,
    )

    out_padded = pl.pallas_call(
        kernel,
        out_shape=jax.ShapeDtypeStruct((b_pad, o_pad), x.dtype),
        grid=grid,
        in_specs=[
            pl.BlockSpec((tm, in_features), lambda i: (i, 0)),      # x tile (pipelined)
            pl.BlockSpec((in_features, h_pad), lambda i: (0, 0)),   # W1 (VMEM-resident)
            pl.BlockSpec((1, h_pad), lambda i: (0, 0)),             # b1
            pl.BlockSpec((h_pad, o_pad), lambda i: (0, 0)),         # W2
            pl.BlockSpec((1, o_pad), lambda i: (0, 0)),             # b2
        ],
        out_specs=pl.BlockSpec((tm, o_pad), lambda i: (i, 0)),
        compiler_params=pltpu.CompilerParams(
            dimension_semantics=("parallel",),
            vmem_limit_bytes=32 * 1024 * 1024,
        ),
    )(xp, w1p, b1p, w2p, b2p)

    return out_padded[:B, :out_features]


def init_params(key, input_size, hidden_size, output_size):
    """Deterministic synthetic parameters (PyTorch Linear-like uniform init)."""
    k1, k2, k3, k4 = jax.random.split(key, 4)
    lim1 = 1.0 / jnp.sqrt(input_size)
    lim2 = 1.0 / jnp.sqrt(hidden_size)
    w1 = jax.random.uniform(k1, (input_size, hidden_size), jnp.float32, -lim1, lim1)
    b1 = jax.random.uniform(k2, (1, hidden_size), jnp.float32, -lim1, lim1)
    w2 = jax.random.uniform(k3, (hidden_size, output_size), jnp.float32, -lim2, lim2)
    b2 = jax.random.uniform(k4, (1, output_size), jnp.float32, -lim2, lim2)
    return w1, b1, w2, b2


if __name__ == "__main__":
    key = jax.random.PRNGKey(0)
    kx, kp = jax.random.split(key)

    batch, input_size, hidden_size, output_size = 8, 32, 64, 16
    x = jax.random.normal(kx, (batch, input_size), dtype=jnp.float32)
    w1, b1, w2, b2 = init_params(kp, input_size, hidden_size, output_size)

    out = mlp_forward(x, w1, b1, w2, b2, seed=42)
    out = jax.block_until_ready(out)

    assert out.shape == (batch, output_size), out.shape
    assert bool(jnp.all(jnp.isfinite(out)))
    print("KERNEL_OK")
</pallas_src>

<mosaic_0001>
module attributes {stable_mosaic.version = 11 : i64} {
  func.func @_mlp_kernel(%arg0: i32, %arg1: memref<8x32xf32, #tpu.memory_space<vmem>>, %arg2: memref<32x128xf32, #tpu.memory_space<vmem>>, %arg3: memref<1x128xf32, #tpu.memory_space<vmem>>, %arg4: memref<128x128xf32, #tpu.memory_space<vmem>>, %arg5: memref<1x128xf32, #tpu.memory_space<vmem>>, %arg6: memref<8x128xf32, #tpu.memory_space<vmem>>) attributes {dimension_semantics = [#tpu.dimension_semantics<parallel>], iteration_bounds = array<i64: 1>, scalar_prefetch = 0 : i64, scratch_operands = 0 : i64, tpu.core_type = #tpu.core_type<tc>, window_params = [{transform_indices = @transform_0, window_bounds = array<i64: 8, 32>}, {pipeline_mode = #tpu.pipeline_mode<synchronous>, transform_indices = @transform_1, window_bounds = array<i64: 32, 128>}, {pipeline_mode = #tpu.pipeline_mode<synchronous>, transform_indices = @transform_2, window_bounds = array<i64: 1, 128>}, {pipeline_mode = #tpu.pipeline_mode<synchronous>, transform_indices = @transform_3, window_bounds = array<i64: 128, 128>}, {pipeline_mode = #tpu.pipeline_mode<synchronous>, transform_indices = @transform_4, window_bounds = array<i64: 1, 128>}, {transform_indices = @transform_5, window_bounds = array<i64: 8, 128>}]} {
    %c0 = arith.constant 0 : index
    %c0_0 = arith.constant 0 : index
    %0 = vector.load %arg1[%c0, %c0_0] : memref<8x32xf32, #tpu.memory_space<vmem>>, vector<8x32xf32>
    %c0_1 = arith.constant 0 : index
    %c0_2 = arith.constant 0 : index
    %1 = vector.load %arg2[%c0_1, %c0_2] : memref<32x128xf32, #tpu.memory_space<vmem>>, vector<32x128xf32>
    %cst = arith.constant dense<0.000000e+00> : vector<8x128xf32>
    %2 = tpu.matmul %0, %1, %cst {dimension_numbers = #tpu.dot_dimension_numbers<[1], [0], [0], [1], [0, 0, 1, 1], [], []>} : vector<8x32xf32>, vector<32x128xf32>, vector<8x128xf32> -> vector<8x128xf32>
    %c0_3 = arith.constant 0 : index
    %c0_4 = arith.constant 0 : index
    %3 = vector.load %arg3[%c0_3, %c0_4] : memref<1x128xf32, #tpu.memory_space<vmem>>, vector<1x128xf32>
    %4 = vector.broadcast %3 : vector<1x128xf32> to vector<8x128xf32>
    %5 = arith.addf %2, %4 : vector<8x128xf32>
    %6 = tpu.iota {dimensions = array<i32: 0>} : vector<8x128xi32>
    %7 = tpu.iota {dimensions = array<i32: 1>} : vector<8x128xi32>
    %c128_i32 = arith.constant 128 : i32
    %8 = vector.broadcast %c128_i32 : i32 to vector<8x128xi32>
    %9 = arith.muli %6, %8 : vector<8x128xi32>
    %10 = arith.addi %9, %7 : vector<8x128xi32>
    %c1024_i32 = arith.constant 1024 : i32
    %11 = arith.muli %arg0, %c1024_i32 : i32
    %12 = vector.broadcast %11 : i32 to vector<8x128xi32>
    %13 = arith.addi %10, %12 : vector<8x128xi32>
    %c1952740463_i32 = arith.constant 1952740463 : i32
    %14 = vector.broadcast %c1952740463_i32 : i32 to vector<8x128xi32>
    %15 = arith.addi %13, %14 : vector<8x128xi32>
    %c16_i32 = arith.constant 16 : i32
    %16 = vector.broadcast %c16_i32 : i32 to vector<8x128xi32>
    %17 = arith.shrui %15, %16 : vector<8x128xi32>
    %18 = arith.xori %15, %17 : vector<8x128xi32>
    %c2146121005_i32 = arith.constant 2146121005 : i32
    %19 = vector.broadcast %c2146121005_i32 : i32 to vector<8x128xi32>
    %20 = arith.muli %18, %19 : vector<8x128xi32>
    %c15_i32 = arith.constant 15 : i32
    %21 = vector.broadcast %c15_i32 : i32 to vector<8x128xi32>
    %22 = arith.shrui %20, %21 : vector<8x128xi32>
    %23 = arith.xori %20, %22 : vector<8x128xi32>
    %c-2073254261_i32 = arith.constant -2073254261 : i32
    %24 = vector.broadcast %c-2073254261_i32 : i32 to vector<8x128xi32>
    %25 = arith.muli %23, %24 : vector<8x128xi32>
    %c16_i32_5 = arith.constant 16 : i32
    %26 = vector.broadcast %c16_i32_5 : i32 to vector<8x128xi32>
    %27 = arith.shrui %25, %26 : vector<8x128xi32>
    %28 = arith.xori %25, %27 : vector<8x128xi32>
    %c-1073741824_i32 = arith.constant -1073741824 : i32
    %29 = vector.broadcast %c-1073741824_i32 : i32 to vector<8x128xi32>
    %30 = arith.cmpi ult, %28, %29 : vector<8x128xi32>
    %cst_6 = arith.constant 0.000000e+00 : f32
    %31 = vector.broadcast %cst_6 : f32 to vector<8x128xf32>
    %32 = arith.cmpf ogt, %5, %31 : vector<8x128xf32>
    %33 = arith.andi %30, %32 : vector<8x128xi1>
    %cst_7 = arith.constant 1.33333337 : f32
    %34 = vector.broadcast %cst_7 : f32 to vector<8x128xf32>
    %35 = arith.mulf %5, %34 : vector<8x128xf32>
    %cst_8 = arith.constant 0.000000e+00 : f32
    %36 = vector.broadcast %cst_8 : f32 to vector<8x128xf32>
    %37 = arith.select %33, %35, %36 : vector<8x128xi1>, vector<8x128xf32>
    %c0_9 = arith.constant 0 : index
    %c0_10 = arith.constant 0 : index
    %38 = vector.load %arg4[%c0_9, %c0_10] : memref<128x128xf32, #tpu.memory_space<vmem>>, vector<128x128xf32>
    %cst_11 = arith.constant dense<0.000000e+00> : vector<8x128xf32>
    %39 = tpu.matmul %37, %38, %cst_11 {dimension_numbers = #tpu.dot_dimension_numbers<[1], [0], [0], [1], [0, 0, 1, 1], [], []>} : vector<8x128xf32>, vector<128x128xf32>, vector<8x128xf32> -> vector<8x128xf32>
    %c0_12 = arith.constant 0 : index
    %c0_13 = arith.constant 0 : index
    %40 = vector.load %arg5[%c0_12, %c0_13] : memref<1x128xf32, #tpu.memory_space<vmem>>, vector<1x128xf32>
    %41 = vector.broadcast %40 : vector<1x128xf32> to vector<8x128xf32>
    %42 = arith.addf %39, %41 : vector<8x128xf32>
    %c0_14 = arith.constant 0 : index
    %c0_15 = arith.constant 0 : index
    %43 = vector.load %arg6[%c0_14, %c0_15] : memref<8x128xf32, #tpu.memory_space<vmem>>, vector<8x128xf32>
    tpu.vector_store %arg6[%c0_14, %c0_15], %42 {strides = array<i32>} : memref<8x128xf32, #tpu.memory_space<vmem>>, vector<8x128xf32>,
    return
  }
  func.func @transform_0(%arg0: i32) -> (i32, i32) {
    %c0_i32 = arith.constant 0 : i32
    %c0_i32_0 = arith.constant 0 : i32
    return %arg0, %c0_i32 : i32, i32
  }
  func.func @transform_1(%arg0: i32) -> (i32, i32) {
    %c0_i32 = arith.constant 0 : i32
    %c0_i32_0 = arith.constant 0 : i32
    %c0_i32_1 = arith.constant 0 : i32
    return %c0_i32, %c0_i32_0 : i32, i32
  }
  func.func @transform_2(%arg0: i32) -> (i32, i32) {
    %c0_i32 = arith.constant 0 : i32
    %c0_i32_0 = arith.constant 0 : i32
    %c0_i32_1 = arith.constant 0 : i32
    return %c0_i32, %c0_i32_0 : i32, i32
  }
  func.func @transform_3(%arg0: i32) -> (i32, i32) {
    %c0_i32 = arith.constant 0 : i32
    %c0_i32_0 = arith.constant 0 : i32
    %c0_i32_1 = arith.constant 0 : i32
    return %c0_i32, %c0_i32_0 : i32, i32
  }
  func.func @transform_4(%arg0: i32) -> (i32, i32) {
    %c0_i32 = arith.constant 0 : i32
    %c0_i32_0 = arith.constant 0 : i32
    %c0_i32_1 = arith.constant 0 : i32
    return %c0_i32, %c0_i32_0 : i32, i32
  }
  func.func @transform_5(%arg0: i32) -> (i32, i32) {
    %c0_i32 = arith.constant 0 : i32
    %c0_i32_0 = arith.constant 0 : i32
    return %arg0, %c0_i32 : i32, i32
  }
}

</mosaic_0001>

<llo_original>
// kernel: tpu_custom_call.1
$region0: #{tpu_custom_call.1}
  #allocation0 [shape = 'u32[]', space=smem, size = 0x4, offset = 0x4, fixed_abs, tag = 'smem constant byte address 0x4 - core index']
  #allocation1 [shape = 'u32[144,128]{1,0:T(1,128)}', space=vmem, size = 0x12000, scoped, tag = 'internal scratch']
  %s0 = inlined_call_operand.hbm [shape: f32[8,32], index: 0, kind: input, shape index: {}]
  %s1 = inlined_call_operand.hbm [shape: f32[32,128], index: 1, kind: input, shape index: {}]
  %s2 = inlined_call_operand.vmem [shape: f32[1,128], index: 2, kind: input, shape index: {}]
  %s3 = inlined_call_operand.hbm [shape: f32[128,128], index: 3, kind: input, shape index: {}]
  %s4 = inlined_call_operand.vmem [shape: f32[1,128], index: 4, kind: input, shape index: {}]
  %s5 = inlined_call_operand.hbm [shape: f32[8,128], index: 5, kind: output, shape index: {}]
  %s6 = sld [smem:[#allocation0]]
  $region42: #{tpu_custom_call.1} parent=0
    _
  %s8 = ssub.s32 1, %s6
  %s9 = scalar_select 0, %s8, %s6
  $region1: #{tpu_custom_call.1} parent=0
    #allocation2 [shape = 'u8[4096]{0}', space=vmem, size = 0x1000, scoped, tag = 'input window, operand 0, single buffered']
    #allocation3 [shape = 's32[1]{0}', space=sflag, size = 0x4, scoped, tag = 'scoped memory for tpu_custom_call.1']
    #allocation4 [shape = 's32[1]{0}', space=sflag, size = 0x4, scoped, tag = 'scoped memory for tpu_custom_call.1']
    #allocation5 [shape = 'u8[16384]{0}', space=vmem, size = 0x4000, scoped, tag = 'input window, operand 1, single buffered']
    #allocation6 [shape = 's32[1]{0}', space=sflag, size = 0x4, scoped, tag = 'scoped memory for tpu_custom_call.1']
    #allocation7 [shape = 'u8[65536]{0}', space=vmem, size = 0x10000, scoped, tag = 'input window, operand 3, single buffered']
    #allocation8 [shape = 'u8[4096]{0}', space=vmem, size = 0x1000, scoped, tag = 'output window, operand 0, single buffered']
    %10 = vsyncpa [#allocation3], 0
    %11 = vsyncpa [#allocation6], 0
    %12 = vsyncpa [#allocation4], 0
    // Predicated region
    $region2: #{tpu_custom_call.1} parent=1 // pred_check
      _
    $region3: #{tpu_custom_call.1} parent=1 // pred_check_branch
      %14 = sbr.rel (0) target = $region5
    $region4: #{tpu_custom_call.1} parent=1 // pred_region
      %s16 = ssub.s32 128, 128
      %17 = vsyncadd [#allocation3], %s16
      %s19 = sshll.u32 [#allocation2], 4
      %s20 = int_to_ptr.vmem [resolvable:$true] %s19
      %22 = dma.hbm_to_vmem [thread:$0]  %s0, 128, %s20, [#allocation3]
    $region5: #{tpu_custom_call.1} parent=1 // pred_fallthru
      _
    // Predicated region
    $region6: #{tpu_custom_call.1} parent=1 // pred_check
      _
    $region7: #{tpu_custom_call.1} parent=1 // pred_check_branch
      %24 = sbr.rel (0) target = $region9
    $region8: #{tpu_custom_call.1} parent=1 // pred_region
      %s26 = ssub.s32 512, 512
      %27 = vsyncadd [#allocation6], %s26
      %s28 = sshll.u32 [#allocation5], 4
      %s29 = int_to_ptr.vmem [resolvable:$true] %s28
      %34 = dma.hbm_to_vmem [thread:$0]  %s1, 512, %s29, [#allocation6], 128, 128, 8
    $region9: #{tpu_custom_call.1} parent=1 // pred_fallthru
      _
    // Predicated region
    $region10: #{tpu_custom_call.1} parent=1 // pred_check
      _
    $region11: #{tpu_custom_call.1} parent=1 // pred_check_branch
      %36 = sbr.rel (0) target = $region13
    $region12: #{tpu_custom_call.1} parent=1 // pred_region
      _
    $region13: #{tpu_custom_call.1} parent=1 // pred_fallthru
      _
    // Predicated region
    $region14: #{tpu_custom_call.1} parent=1 // pred_check
      _
    $region15: #{tpu_custom_call.1} parent=1 // pred_check_branch
      %38 = sbr.rel (0) target = $region17
    $region16: #{tpu_custom_call.1} parent=1 // pred_region
      %s40 = ssub.s32 2048, 2048
      %41 = vsyncadd [#allocation6], %s40
      %s42 = sshll.u32 [#allocation7], 4
      %s43 = int_to_ptr.vmem [resolvable:$true] %s42
      %48 = dma.hbm_to_vmem [thread:$0]  %s3, 2048, %s43, [#allocation6], 128, 128, 8
    $region17: #{tpu_custom_call.1} parent=1 // pred_fallthru
      _
    // Predicated region
    $region18: #{tpu_custom_call.1} parent=1 // pred_check
      _
    $region19: #{tpu_custom_call.1} parent=1 // pred_check_branch
      %50 = sbr.rel (0) target = $region21
    $region20: #{tpu_custom_call.1} parent=1 // pred_region
      _
    $region21: #{tpu_custom_call.1} parent=1 // pred_fallthru
      _
    // Predicated region
    $region22: #{tpu_custom_call.1} parent=1 // pred_check
      _
    $region23: #{tpu_custom_call.1} parent=1 // pred_check_branch
      %52 = sbr.rel (0) target = $region25
    $region24: #{tpu_custom_call.1} parent=1 // pred_region
      %53 = dma.done [#allocation3], 128
    $region25: #{tpu_custom_call.1} parent=1 // pred_fallthru
      _
    // Predicated region
    $region26: #{tpu_custom_call.1} parent=1 // pred_check
      _
    $region27: #{tpu_custom_call.1} parent=1 // pred_check_branch
      %55 = sbr.rel (0) target = $region29
    $region28: #{tpu_custom_call.1} parent=1 // pred_region
      %56 = dma.done [#allocation6], 512
    $region29: #{tpu_custom_call.1} parent=1 // pred_fallthru
      _
    // Predicated region
    $region30: #{tpu_custom_call.1} parent=1 // pred_check
      _
    $region31: #{tpu_custom_call.1} parent=1 // pred_check_branch
      %58 = sbr.rel (0) target = $region33
    $region32: #{tpu_custom_call.1} parent=1 // pred_region
      %59 = dma.done [#allocation6], 2048
    $region33: #{tpu_custom_call.1} parent=1 // pred_fallthru
      _
    %v60 = vld [vmem:[#allocation2] sm:$0xff]
    %v61 = vld [vmem:[#allocation5] sm:$0xff]
    %v62 = vld [vmem:[#allocation5 + $0x8] sm:$0xff]
    %v63 = vld [vmem:[#allocation5 + $0x10] sm:$0xff]
    %v64 = vld [vmem:[#allocation5 + $0x18] sm:$0xff]
    %v65 = vld [vmem:[%s2] sm:$0x1]
    %v67 = vlaneseq
    %v68 = vshrl.u32 %v67, 7
    %v69 = vsub.s32 0, %v68
    %v70 = vrot.slane %v65, %v69
    %vm72 = vcmask 261120
    %v74 = vsel %vm72, %v60, 0
    %76 = vmatprep.subr.mxu0 0.0
    %77 = vmatpush1.msra.mxu0 0.0
    %78 = vmatprep.subr.mxu0 0.0
    %79 = vmatpush1.msra.mxu0 0.0
    %80 = vmatprep.subr.mxu0 0.0
    %81 = vmatpush1.msra.mxu0 0.0
    %82 = vmatprep.subr.mxu0 0.0
    %83 = vmatpush1.msra.mxu0 0.0
    %84 = vmatprep.subr.mxu0 0.0
    %85 = vmatpush1.msra.mxu0 0.0
    %86 = vmatprep.subr.mxu0 0.0
    %87 = vmatpush1.msra.mxu0 0.0
    %88 = vmatprep.subr.mxu0 0.0
    %89 = vmatpush1.msra.mxu0 0.0
    %90 = vmatprep.subr.mxu0 0.0
    %91 = vmatpush1.msra.mxu0 0.0
    %92 = vmatprep.subr.mxu0 0.0
    %93 = vmatpush1.msra.mxu0 0.0
    %94 = vmatprep.subr.mxu0 0.0
    %95 = vmatpush1.msra.mxu0 0.0
    %96 = vmatprep.subr.mxu0 0.0
    %97 = vmatpush1.msra.mxu0 0.0
    %98 = vmatprep.subr.mxu0 0.0
    %99 = vmatpush1.msra.mxu0 0.0
    %100 = vmatprep.subr.mxu0 0.0
    %101 = vmatpush1.msra.mxu0 %v64
    %102 = vmatprep.subr.mxu0 0.0
    %103 = vmatpush1.msra.mxu0 %v63
    %104 = vmatprep.subr.mxu0 0.0
    %105 = vmatpush1.msra.mxu0 %v62
    %106 = vmatprep.subr.mxu0 0.0
    %107 = vmatpush1.msra.mxu0 %v61
    %108 = vmatprep.subr.mxu0 0.0
    %109 = vmatpush2.msra.mxu0 0.0
    %110 = vmatprep.subr.mxu0 0.0
    %111 = vmatpush2.msra.mxu0 0.0
    %112 = vmatprep.subr.mxu0 0.0
    %113 = vmatpush2.msra.mxu0 0.0
    %114 = vmatprep.subr.mxu0 0.0
    %115 = vmatpush2.msra.mxu0 0.0
    %116 = vmatprep.subr.mxu0 0.0
    %117 = vmatpush2.msra.mxu0 0.0
    %118 = vmatprep.subr.mxu0 0.0
    %119 = vmatpush2.msra.mxu0 0.0
    %120 = vmatprep.subr.mxu0 0.0
    %121 = vmatpush2.msra.mxu0 0.0
    %122 = vmatprep.subr.mxu0 0.0
    %123 = vmatpush2.msra.mxu0 0.0
    %124 = vmatprep.subr.mxu0 0.0
    %125 = vmatpush2.msra.mxu0 0.0
    %126 = vmatprep.subr.mxu0 0.0
    %127 = vmatpush2.msra.mxu0 0.0
    %128 = vmatprep.subr.mxu0 0.0
    %129 = vmatpush2.msra.mxu0 0.0
    %130 = vmatprep.subr.mxu0 0.0
    %131 = vmatpush2.msra.mxu0 0.0
    %132 = vmatprep.subr.mxu0 0.0
    %133 = vmatpush2.msra.mxu0 0.0
    %134 = vmatprep.subr.mxu0 0.0
    %135 = vmatpush2.msra.mxu0 0.0
    %136 = vmatprep.subr.mxu0 0.0
    %137 = vmatpush2.msra.mxu0 0.0
    %138 = vmatprep.subr.mxu0 0.0
    %139 = vmatpush2.msra.mxu0 0.0
    %140 = vmatprep.mubr.f32.mxu0 0.0
    %141 = vmatmul.mubr.f32.gmra.mxu0 %v74
    %v142 = vpop.f32.mrf.mxu0
    %v143 = vadd.f32 %v70, %v142
    %v144 = vpop.f32.mrf.mxu0
    %145 = vdwg.mxu0
    %v146 = vlaneseq
    %v147 = vshrl.u32 %v146, 7
    %v148 = vlaneseq
    %v149 = vand.u32 %v148, 127
    %v150 = vmul.u32 %v147, 128
    %v151 = vadd.s32 %v150, %v149
    %s152 = smul.u32 0, 1024
    %v153 = vstv %s152
    %v154 = vadd.s32 %v151, %v153
    %v155 = vadd.s32 %v154, 1952740463
    %v156 = vshrl.u32 %v155, 16
    %v157 = vxor.u32 %v155, %v156
    %v158 = vmul.u32 %v157, 2146121005
    %v159 = vshrl.u32 %v158, 15
    %v160 = vxor.u32 %v158, %v159
    %v161 = vmul.u32 %v160, 2221713035
    %v162 = vshrl.u32 %v161, 16
    %v163 = vxor.u32 %v161, %v162
    %vm164 = vcmp.lt.u32.totalorder %v163, 3221225472
    %vm165 = vcmp.gt.f32.partialorder %v143, 0.0
    %vm166 = vmand %vm164, %vm165
    %v167 = vmul.f32 %v143, 1.3333334
    %v168 = vsel %vm166, %v167, 0.0
    %v169 = vld [vmem:[#allocation7] sm:$0xff]
    %v170 = vld [vmem:[#allocation7 + $0x8] sm:$0xff]
    %v171 = vld [vmem:[#allocation7 + $0x10] sm:$0xff]
    %v172 = vld [vmem:[#allocation7 + $0x18] sm:$0xff]
    %v173 = vld [vmem:[#allocation7 + $0x20] sm:$0xff]
    %v174 = vld [vmem:[#allocation7 + $0x28] sm:$0xff]
    %v175 = vld [vmem:[#allocation7 + $0x30] sm:$0xff]
    %v176 = vld [vmem:[#allocation7 + $0x38] sm:$0xff]
    %v177 = vld [vmem:[#allocation7 + $0x40] sm:$0xff]
    %v178 = vld [vmem:[#allocation7 + $0x48] sm:$0xff]
    %v179 = vld [vmem:[#allocation7 + $0x50] sm:$0xff]
    %v180 = vld [vmem:[#allocation7 + $0x58] sm:$0xff]
    %v181 = vld [vmem:[#allocation7 + $0x60] sm:$0xff]
    %v182 = vld [vmem:[#allocation7 + $0x68] sm:$0xff]
    %v183 = vld [vmem:[#allocation7 + $0x70] sm:$0xff]
    %v184 = vld [vmem:[#allocation7 + $0x78] sm:$0xff]
    %v185 = vld [vmem:[%s4] sm:$0x1]
    %v187 = vlaneseq
    %v188 = vshrl.u32 %v187, 7
    %v189 = vsub.s32 0, %v188
    %v190 = vrot.slane %v185, %v189
    %192 = vmatprep.subr.mxu0 0.0
    %193 = vmatpush1.msra.mxu0 %v184
    %194 = vmatprep.subr.mxu0 0.0
    %195 = vmatpush1.msra.mxu0 %v183
    %196 = vmatprep.subr.mxu0 0.0
    %197 = vmatpush1.msra.mxu0 %v182
    %198 = vmatprep.subr.mxu0 0.0
    %199 = vmatpush1.msra.mxu0 %v181
    %200 = vmatprep.subr.mxu0 0.0
    %201 = vmatpush1.msra.mxu0 %v180
    %202 = vmatprep.subr.mxu0 0.0
    %203 = vmatpush1.msra.mxu0 %v179
    %204 = vmatprep.subr.mxu0 0.0
    %205 = vmatpush1.msra.mxu0 %v178
    %206 = vmatprep.subr.mxu0 0.0
    %207 = vmatpush1.msra.mxu0 %v177
    %208 = vmatprep.subr.mxu0 0.0
    %209 = vmatpush1.msra.mxu0 %v176
    %210 = vmatprep.subr.mxu0 0.0
    %211 = vmatpush1.msra.mxu0 %v175
    %212 = vmatprep.subr.mxu0 0.0
    %213 = vmatpush1.msra.mxu0 %v174
    %214 = vmatprep.subr.mxu0 0.0
    %215 = vmatpush1.msra.mxu0 %v173
    %216 = vmatprep.subr.mxu0 0.0
    %217 = vmatpush1.msra.mxu0 %v172
    %218 = vmatprep.subr.mxu0 0.0
    %219 = vmatpush1.msra.mxu0 %v171
    %220 = vmatprep.subr.mxu0 0.0
    %221 = vmatpush1.msra.mxu0 %v170
    %222 = vmatprep.subr.mxu0 0.0
    %223 = vmatpush1.msra.mxu0 %v169
    %224 = vmatprep.subr.mxu0 0.0
    %225 = vmatpush2.msra.mxu0 0.0
    %226 = vmatprep.subr.mxu0 0.0
    %227 = vmatpush2.msra.mxu0 0.0
    %228 = vmatprep.subr.mxu0 0.0
    %229 = vmatpush2.msra.mxu0 0.0
    %230 = vmatprep.subr.mxu0 0.0
    %231 = vmatpush2.msra.mxu0 0.0
    %232 = vmatprep.subr.mxu0 0.0
    %233 = vmatpush2.msra.mxu0 0.0
    %234 = vmatprep.subr.mxu0 0.0
    %235 = vmatpush2.msra.mxu0 0.0
    %236 = vmatprep.subr.mxu0 0.0
    %237 = vmatpush2.msra.mxu0 0.0
    %238 = vmatprep.subr.mxu0 0.0
    %239 = vmatpush2.msra.mxu0 0.0
    %240 = vmatprep.subr.mxu0 0.0
    %241 = vmatpush2.msra.mxu0 0.0
    %242 = vmatprep.subr.mxu0 0.0
    %243 = vmatpush2.msra.mxu0 0.0
    %244 = vmatprep.subr.mxu0 0.0
    %245 = vmatpush2.msra.mxu0 0.0
    %246 = vmatprep.subr.mxu0 0.0
    %247 = vmatpush2.msra.mxu0 0.0
    %248 = vmatprep.subr.mxu0 0.0
    %249 = vmatpush2.msra.mxu0 0.0
    %250 = vmatprep.subr.mxu0 0.0
    %251 = vmatpush2.msra.mxu0 0.0
    %252 = vmatprep.subr.mxu0 0.0
    %253 = vmatpush2.msra.mxu0 0.0
    %254 = vmatprep.subr.mxu0 0.0
    %255 = vmatpush2.msra.mxu0 0.0
    %256 = vmatprep.mubr.f32.mxu0 0.0
    %257 = vmatmul.mubr.f32.gmra.mxu0 %v168
    %v258 = vpop.f32.mrf.mxu0
    %v259 = vadd.f32 %v190, %v258
    %v260 = vpop.f32.mrf.mxu0
    %261 = vdwg.mxu0
    %262 = vst [vmem:[#allocation8] sm:$0xff] %v259
    // Predicated region
    $region34: #{tpu_custom_call.1} parent=1 // pred_check
      _
    $region35: #{tpu_custom_call.1} parent=1 // pred_check_branch
      %264 = sbr.rel (0) target = $region37
    $region36: #{tpu_custom_call.1} parent=1 // pred_region
      %s266 = ssub.s32 128, 128
      %267 = vsyncadd [#allocation4], %s266
      %s269 = sshll.u32 [#allocation8], 4
      %s270 = int_to_ptr.vmem [resolvable:$true] %s269
      %272 = dma.vmem_to_hbm [thread:$0]  %s270, 128, %s5, [#allocation4]
    $region37: #{tpu_custom_call.1} parent=1 // pred_fallthru
      _
    // Predicated region
    $region38: #{tpu_custom_call.1} parent=1 // pred_check
      _
    $region39: #{tpu_custom_call.1} parent=1 // pred_check_branch
      %274 = sbr.rel (0) target = $region41
    $region40: #{tpu_custom_call.1} parent=1 // pred_region
      %275 = dma.done [#allocation4], 128
    $region41: #{tpu_custom_call.1} parent=1 // pred_fallthru
      _
    %276 = vsyncpa [#allocation3], 1
    %277 = vsyncpa [#allocation6], 1
    %278 = vsyncpa [#allocation4], 1

</llo_original>
